<compile_context>
chip_gen: v7x
topology: tpu7x:2x2x1
jax: 0.10.0
libtpu: 0.0.40
codegen_flags: <defaults>
</compile_context>

<pallas_src>
import functools

import jax
import jax.numpy as jnp
from jax import lax
from jax.experimental import pallas as pl
from jax.experimental.pallas import tpu as pltpu


def _rmsnorm_kernel(x_ref, w_ref, o_ref, *, eps: float, inv_dim: float):
    # x_ref: (rows_tile, dim_p) tile; w_ref: (1, dim_p); o_ref: like x_ref.
    x32 = x_ref[...].astype(jnp.float32)                       # x.float()
    # sum(x^2)/true_dim == mean over the real dim; padded lanes are zero.
    ms = jnp.sum(x32 * x32, axis=-1, keepdims=True) * inv_dim
    y32 = x32 * lax.rsqrt(ms + eps)                            # x * rsqrt(ms + eps)
    # Fused f32 weight multiply, single downcast to the output dtype.
    o_ref[...] = (y32 * w_ref[...].astype(jnp.float32)).astype(o_ref.dtype)


def _round_up(n: int, m: int) -> int:
    return ((n + m - 1) // m) * m


def _choose_rows_tile(rows: int, dim_p: int, itemsize: int, sublane: int) -> int:
    # Per grid step (double-buffered in + out tiles, plus f32 intermediates):
    #   ~ dim_p * rows_tile * (2*itemsize_in + 2*itemsize_out + f32 temps)
    # Keep the working set under ~32 MiB so it also fits v7x's 64 MiB VMEM.
    budget = 32 * 1024 * 1024
    per_row_bytes = dim_p * (4 * itemsize + 2 * 4)
    t = budget // max(per_row_bytes, 1)
    t = min(t, 1024)                                  # diminishing returns past ~1K rows
    t = max((t // sublane) * sublane, sublane)        # dtype-aware sublane multiple
    rows_needed = _round_up(rows, sublane)
    return max(min(t, rows_needed), sublane)


def rmsnorm(x, weight=None, *, eps: float = 1e-6):
    """RMSNorm over the last axis of x. weight has shape (dim,) or is None."""
    orig_shape = x.shape
    dim = orig_shape[-1]
    rows = 1
    for s in orig_shape[:-1]:
        rows *= s

    if weight is None:
        # elementwise_affine=False path: identity weight.
        weight = jnp.ones((dim,), dtype=x.dtype)

    itemsize = jnp.dtype(x.dtype).itemsize
    sublane = {1: 32, 2: 16, 4: 8}.get(itemsize, 8)

    # Lane-dense last dim: pad to a multiple of 128.
    dim_p = max(128, _round_up(dim, 128))

    rows_tile = _choose_rows_tile(rows, dim_p, itemsize, sublane)
    rows_p = _round_up(rows, rows_tile)
    grid = rows_p // rows_tile

    x2d = x.reshape(rows, dim)
    w2d = weight.reshape(1, dim)
    if dim_p != dim:
        x2d = jnp.pad(x2d, ((0, 0), (0, dim_p - dim)))
        w2d = jnp.pad(w2d, ((0, 0), (0, dim_p - dim)))
    if rows_p != rows:
        x2d = jnp.pad(x2d, ((0, rows_p - rows), (0, 0)))

    # Explicit VMEM budget: double-buffered in/out tiles + weight + f32 temps.
    tile_bytes = rows_tile * dim_p * itemsize
    working = (4 * tile_bytes
               + 2 * dim_p * jnp.dtype(w2d.dtype).itemsize
               + 2 * rows_tile * dim_p * 4)
    vmem_limit = int(min(max(2 * working, 16 << 20), 48 << 20))

    cost = pl.CostEstimate(
        flops=4 * rows * dim,
        transcendentals=rows,
        bytes_accessed=2 * rows * dim * itemsize + dim * itemsize,
    )

    out = pl.pallas_call(
        functools.partial(_rmsnorm_kernel, eps=eps, inv_dim=1.0 / dim),
        out_shape=jax.ShapeDtypeStruct((rows_p, dim_p), x.dtype),
        grid_spec=pltpu.PrefetchScalarGridSpec(
            num_scalar_prefetch=0,
            grid=(grid,),
            in_specs=[
                pl.BlockSpec((rows_tile, dim_p), lambda i: (i, 0)),
                pl.BlockSpec((1, dim_p), lambda i: (0, 0)),
            ],
            out_specs=pl.BlockSpec((rows_tile, dim_p), lambda i: (i, 0)),
        ),
        compiler_params=pltpu.CompilerParams(
            dimension_semantics=("parallel",),
            vmem_limit_bytes=vmem_limit,
        ),
        cost_estimate=cost,
    )(x2d, w2d)

    out = out[:rows, :dim]
    return out.reshape(orig_shape)


def rmsnorm_ref(x, weight, eps=1e-6):
    x32 = x.astype(jnp.float32)
    y = x32 * lax.rsqrt(jnp.mean(x32 * x32, axis=-1, keepdims=True) + eps)
    y = y.astype(x.dtype)
    if weight is not None:
        y = y * weight
    return y


if __name__ == "__main__":
    key = jax.random.PRNGKey(0)

    # Case 1: lane-dense dim (multiple of 128) -- representative fast path.
    batch, seq, dim = 2, 8, 256
    x = jax.random.normal(key, (batch, seq, dim), dtype=jnp.float32)
    weight = jnp.ones((dim,), dtype=jnp.float32)   # nn.Parameter(torch.ones(dim))
    out = jax.block_until_ready(rmsnorm(x, weight, eps=1e-6))
    ref = rmsnorm_ref(x, weight, eps=1e-6)
    assert out.shape == x.shape and out.dtype == x.dtype
    assert jnp.allclose(out, ref, atol=1e-5, rtol=1e-5)

    # Case 2: small dim (< 128) -- exercises the lane-padding path.
    dim2 = 32
    x2 = jax.random.normal(jax.random.PRNGKey(1), (batch, seq, dim2),
                           dtype=jnp.float32)
    w2 = jnp.ones((dim2,), dtype=jnp.float32)
    out2 = jax.block_until_ready(rmsnorm(x2, w2, eps=1e-6))
    ref2 = rmsnorm_ref(x2, w2, eps=1e-6)
    assert out2.shape == x2.shape and out2.dtype == x2.dtype
    assert jnp.allclose(out2, ref2, atol=1e-5, rtol=1e-5)

    # Case 3: elementwise_affine=False (weight is None).
    out3 = jax.block_until_ready(rmsnorm(x, None, eps=1e-6))
    ref3 = rmsnorm_ref(x, None, eps=1e-6)
    assert jnp.allclose(out3, ref3, atol=1e-5, rtol=1e-5)

    print("KERNEL_OK")
</pallas_src>

<mosaic_0001>
module attributes {stable_mosaic.version = 11 : i64} {
  func.func @_rmsnorm_kernel(%arg0: i32, %arg1: memref<16x256xf32, #tpu.memory_space<vmem>>, %arg2: memref<1x256xf32, #tpu.memory_space<vmem>>, %arg3: memref<16x256xf32, #tpu.memory_space<vmem>>) attributes {dimension_semantics = [#tpu.dimension_semantics<parallel>], iteration_bounds = array<i64: 1>, scalar_prefetch = 0 : i64, scratch_operands = 0 : i64, tpu.core_type = #tpu.core_type<tc>, window_params = [{transform_indices = @transform_0, window_bounds = array<i64: 16, 256>}, {pipeline_mode = #tpu.pipeline_mode<synchronous>, transform_indices = @transform_1, window_bounds = array<i64: 1, 256>}, {transform_indices = @transform_2, window_bounds = array<i64: 16, 256>}]} {
    %c0 = arith.constant 0 : index
    %c0_0 = arith.constant 0 : index
    %0 = vector.load %arg1[%c0, %c0_0] : memref<16x256xf32, #tpu.memory_space<vmem>>, vector<16x256xf32>
    %1 = arith.mulf %0, %0 : vector<16x256xf32>
    %cst = arith.constant dense<0.000000e+00> : vector<16xf32>
    %2 = vector.multi_reduction <add>, %1, %cst [1] : vector<16x256xf32> to vector<16xf32>
    %3 = vector.shape_cast %2 : vector<16xf32> to vector<16x1xf32>
    %cst_1 = arith.constant 3.906250e-03 : f32
    %4 = vector.broadcast %cst_1 : f32 to vector<16x1xf32>
    %5 = arith.mulf %3, %4 : vector<16x1xf32>
    %cst_2 = arith.constant 9.99999997E-7 : f32
    %6 = vector.broadcast %cst_2 : f32 to vector<16x1xf32>
    %7 = arith.addf %5, %6 : vector<16x1xf32>
    %8 = math.rsqrt %7 : vector<16x1xf32>
    %9 = vector.broadcast %8 : vector<16x1xf32> to vector<16x256xf32>
    %10 = arith.mulf %0, %9 : vector<16x256xf32>
    %c0_3 = arith.constant 0 : index
    %c0_4 = arith.constant 0 : index
    %11 = vector.load %arg2[%c0_3, %c0_4] : memref<1x256xf32, #tpu.memory_space<vmem>>, vector<1x256xf32>
    %12 = vector.broadcast %11 : vector<1x256xf32> to vector<16x256xf32>
    %13 = arith.mulf %10, %12 : vector<16x256xf32>
    %c0_5 = arith.constant 0 : index
    %c0_6 = arith.constant 0 : index
    %14 = vector.load %arg3[%c0_5, %c0_6] : memref<16x256xf32, #tpu.memory_space<vmem>>, vector<16x256xf32>
    tpu.vector_store %arg3[%c0_5, %c0_6], %13 {strides = array<i32>} : memref<16x256xf32, #tpu.memory_space<vmem>>, vector<16x256xf32>,
    return
  }
  func.func @transform_0(%arg0: i32) -> (i32, i32) {
    %c0_i32 = arith.constant 0 : i32
    %c0_i32_0 = arith.constant 0 : i32
    return %arg0, %c0_i32 : i32, i32
  }
  func.func @transform_1(%arg0: i32) -> (i32, i32) {
    %c0_i32 = arith.constant 0 : i32
    %c0_i32_0 = arith.constant 0 : i32
    %c0_i32_1 = arith.constant 0 : i32
    return %c0_i32, %c0_i32_0 : i32, i32
  }
  func.func @transform_2(%arg0: i32) -> (i32, i32) {
    %c0_i32 = arith.constant 0 : i32
    %c0_i32_0 = arith.constant 0 : i32
    return %arg0, %c0_i32 : i32, i32
  }
}

</mosaic_0001>

<llo_original>
// kernel: tpu_custom_call.1
$region0: #{tpu_custom_call.1}
  #allocation0 [shape = 'u32[]', space=smem, size = 0x4, offset = 0x4, fixed_abs, tag = 'smem constant byte address 0x4 - core index']
  #allocation1 [shape = 'u32[144,128]{1,0:T(1,128)}', space=vmem, size = 0x12000, scoped, tag = 'internal scratch']
  %s0 = inlined_call_operand.hbm [shape: f32[16,256], index: 0, kind: input, shape index: {}]
  %s1 = inlined_call_operand.vmem [shape: f32[1,256], index: 1, kind: input, shape index: {}]
  %s2 = inlined_call_operand.hbm [shape: f32[16,256], index: 2, kind: output, shape index: {}]
  %s3 = sld [smem:[#allocation0]]
  $region22: #{tpu_custom_call.1} parent=0
    _
  %s5 = ssub.s32 1, %s3
  %s6 = scalar_select 0, %s5, %s3
  $region1: #{tpu_custom_call.1} parent=0
    #allocation2 [shape = 'u8[16384]{0}', space=vmem, size = 0x4000, scoped, tag = 'input window, operand 0, single buffered']
    #allocation3 [shape = 's32[1]{0}', space=sflag, size = 0x4, scoped, tag = 'scoped memory for tpu_custom_call.1']
    #allocation4 [shape = 's32[1]{0}', space=sflag, size = 0x4, scoped, tag = 'scoped memory for tpu_custom_call.1']
    #allocation5 [shape = 'u8[16384]{0}', space=vmem, size = 0x4000, scoped, tag = 'output window, operand 0, single buffered']
    %7 = vsyncpa [#allocation3], 0
    %8 = vsyncpa [#allocation4], 0
    // Predicated region
    $region2: #{tpu_custom_call.1} parent=1 // pred_check
      _
    $region3: #{tpu_custom_call.1} parent=1 // pred_check_branch
      %10 = sbr.rel (0) target = $region5
    $region4: #{tpu_custom_call.1} parent=1 // pred_region
      %s12 = ssub.s32 512, 512
      %13 = vsyncadd [#allocation3], %s12
      %s14 = sshll.u32 [#allocation2], 4
      %s15 = int_to_ptr.vmem [resolvable:$true] %s14
      %20 = dma.hbm_to_vmem [thread:$0]  %s0, 512, %s15, [#allocation3], 256, 256, 16
    $region5: #{tpu_custom_call.1} parent=1 // pred_fallthru
      _
    // Predicated region
    $region6: #{tpu_custom_call.1} parent=1 // pred_check
      _
    $region7: #{tpu_custom_call.1} parent=1 // pred_check_branch
      %22 = sbr.rel (0) target = $region9
    $region8: #{tpu_custom_call.1} parent=1 // pred_region
      _
    $region9: #{tpu_custom_call.1} parent=1 // pred_fallthru
      _
    // Predicated region
    $region10: #{tpu_custom_call.1} parent=1 // pred_check
      _
    $region11: #{tpu_custom_call.1} parent=1 // pred_check_branch
      %24 = sbr.rel (0) target = $region13
    $region12: #{tpu_custom_call.1} parent=1 // pred_region
      %25 = dma.done [#allocation3], 512
    $region13: #{tpu_custom_call.1} parent=1 // pred_fallthru
      _
    %v26 = vld [vmem:[#allocation2] sm:$0xff]
    %v27 = vld [vmem:[#allocation2 + $0x8] sm:$0xff]
    %v28 = vld [vmem:[#allocation2 + $0x10] sm:$0xff]
    %v29 = vld [vmem:[#allocation2 + $0x18] sm:$0xff]
    %v30 = vmul.f32 %v26, %v26
    %v31 = vmul.f32 %v27, %v27
    %v32 = vmul.f32 %v28, %v28
    %v33 = vmul.f32 %v29, %v29
    %v34 = vadd.f32 %v30, %v31
    %35 = vadd.xlane.f32.xlu0 %v34
    %v36 = vpop.xlane.xlu0 %35
    %v37 = vadd.f32 %v32, %v33
    %38 = vadd.xlane.f32.xlu0 %v37
    %v39 = vpop.xlane.xlu0 %38
    %v40 = vmul.f32 %v36, 0.00390625
    %v41 = vmul.f32 %v39, 0.00390625
    %v42 = vadd.f32 %v40, 1e-06
    %v43 = vadd.f32 %v41, 1e-06
    %v44 = vrsqrt.pop %v42
    %v45 = vrsqrt.pop %v43
    %v46 = vmul.f32 %v26, %v44
    %v47 = vmul.f32 %v27, %v44
    %v48 = vmul.f32 %v28, %v45
    %v49 = vmul.f32 %v29, %v45
    %v50 = vld [vmem:[%s1] sm:$0x3]
    %v52 = vlaneseq
    %v53 = vshrl.u32 %v52, 7
    %v54 = vsub.s32 0, %v53
    %v55 = vrot.slane %v50, %v54
    %v56 = vlaneseq
    %v57 = vshrl.u32 %v56, 7
    %v58 = vsub.s32 1, %v57
    %v59 = vrot.slane %v50, %v58
    %v62 = vmul.f32 %v46, %v55
    %v63 = vmul.f32 %v47, %v59
    %v64 = vmul.f32 %v48, %v55
    %v65 = vmul.f32 %v49, %v59
    %66 = vst [vmem:[#allocation5] sm:$0xff] %v62
    %67 = vst [vmem:[#allocation5 + $0x8] sm:$0xff] %v63
    %68 = vst [vmem:[#allocation5 + $0x10] sm:$0xff] %v64
    %69 = vst [vmem:[#allocation5 + $0x18] sm:$0xff] %v65
    // Predicated region
    $region14: #{tpu_custom_call.1} parent=1 // pred_check
      _
    $region15: #{tpu_custom_call.1} parent=1 // pred_check_branch
      %71 = sbr.rel (0) target = $region17
    $region16: #{tpu_custom_call.1} parent=1 // pred_region
      %s73 = ssub.s32 512, 512
      %74 = vsyncadd [#allocation4], %s73
      %s75 = sshll.u32 [#allocation5], 4
      %s76 = int_to_ptr.vmem [resolvable:$true] %s75
      %81 = dma.vmem_to_hbm [thread:$0]  %s76, 512, %s2, [#allocation4], 256, 256, 16
    $region17: #{tpu_custom_call.1} parent=1 // pred_fallthru
      _
    // Predicated region
    $region18: #{tpu_custom_call.1} parent=1 // pred_check
      _
    $region19: #{tpu_custom_call.1} parent=1 // pred_check_branch
      %83 = sbr.rel (0) target = $region21
    $region20: #{tpu_custom_call.1} parent=1 // pred_region
      %84 = dma.done [#allocation4], 512
    $region21: #{tpu_custom_call.1} parent=1 // pred_fallthru
      _
    %85 = vsyncpa [#allocation3], 1
    %86 = vsyncpa [#allocation4], 1

</llo_original>
